<compile_context>
chip_gen: v7x
topology: tpu7x:2x2x1
jax: 0.10.0
libtpu: 0.0.40
codegen_flags: <defaults>
</compile_context>

<pallas_src>
import functools

import jax
import jax.numpy as jnp
from jax import lax
from jax.experimental import pallas as pl
from jax.experimental.pallas import tpu as pltpu

NEG_INF = -1e30
LANE = 128


def _gat_layer(h_in, mask_add, w, a_src, a_dst, b):
    """One GATConv (heads=1, concat=True) on a dense additive adjacency mask.

    h_in:     (N, K_p)  node features, padded lanes are exactly 0
    mask_add: (N, N)    0 where edge j -> i (incl. self loop), -1e30 else
    w:        (K_p, F_p) zero-padded linear weight (no bias, as in GATConv.lin)
    a_src, a_dst, b: (1, F_p) zero-padded attention vectors / output bias
    """
    h = jnp.dot(h_in, w, preferred_element_type=jnp.float32)            # (N, F_p) MXU
    # NOTE: folding a_dst/a_src into spare padded W columns would remove these
    # XLU reduces, but makes padded output lanes non-zero; skipped for safety.
    alpha_dst = jnp.sum(h * a_dst, axis=-1, keepdims=True)              # (N, 1)  VPU + XLU
    # Source logits directly in row layout: (1, F_p) x (N, F_p)^T -> (1, N).
    alpha_src_row = lax.dot_general(a_src, h, (((1,), (1,)), ((), ())),
                                    preferred_element_type=jnp.float32)  # (1, N)
    e = alpha_dst + alpha_src_row                                        # (N, N) broadcast add
    e = jnp.where(e > 0, e, 0.2 * e)                                     # LeakyReLU(0.2)
    e = e + mask_add                                                     # additive edge mask
    e = e - jnp.max(e, axis=-1, keepdims=True)                           # finite: self-loops exist
    p = jnp.exp(e)                                # masked entries underflow to exactly 0
    inv_l = pl.reciprocal(jnp.sum(p, axis=-1, keepdims=True), approx=True)
    att = p * inv_l                                                      # row softmax
    return jnp.dot(att, h, preferred_element_type=jnp.float32) + b       # (N, F_p)


def gat_kernel(x_ref, mask_ref, w_ref, vecs_ref, out_ref, *, khid_p, f_out):
    x = x_ref[...]                                              # (N, Kin_p)
    # Additive edge mask built once in-kernel from the raw 0/1 adjacency mask
    # (avoids shipping a pre-expanded f32 bias array), reused by both layers.
    # Every row has a self-loop, so every row of the softmax stays finite.
    mask_add = jnp.where(mask_ref[...] > 0, 0.0, NEG_INF)       # (N, N)

    w1 = w_ref[0]                                               # (Kin_p, 128)
    w2 = w_ref[1]                                               # (Khid_p, 128)
    as1 = vecs_ref[0:1, :]
    ad1 = vecs_ref[1:2, :]
    b1 = vecs_ref[2:3, :]
    as2 = vecs_ref[3:4, :]
    ad2 = vecs_ref[4:5, :]
    b2 = vecs_ref[5:6, :]

    h1 = _gat_layer(x, mask_add, w1, as1, ad1, b1)
    h1 = jnp.maximum(h1, 0.0)          # activation = relu; Dropout(p=0) == identity
    # Layer 2 only contracts over the first khid_p feature lanes; lanes beyond
    # f_hid are exactly 0 in both h1 and (the zero-padded rows of) w2.
    h2 = _gat_layer(h1[:, :khid_p], mask_add, w2, as2, ad2, b2)

    # torch.softmax(x, dim=1) over the (padded) feature axis; padded lanes are
    # masked via an in-kernel iota compare so they contribute exactly 0.
    lane = lax.broadcasted_iota(jnp.int32, h2.shape, 1)
    z = jnp.where(lane < f_out, h2, NEG_INF)
    z = z - jnp.max(z, axis=-1, keepdims=True)
    ez = jnp.exp(z)
    # Exact divide for the final output softmax (accuracy; cost negligible).
    out_ref[...] = ez / jnp.sum(ez, axis=-1, keepdims=True)     # lane-dense (N, 128) store


def _round_up(v, m):
    return ((v + m - 1) // m) * m


def _pad2(a, rows, cols):
    a = jnp.asarray(a, jnp.float32)
    return jnp.pad(a, ((0, rows - a.shape[0]), (0, cols - a.shape[1])))


def prepare_inputs(params, mask):
    """One-time (init-path) padding/packing of parameters and the edge mask.

    Returns (mask_f32, w_stack, vecs, dims) with
      w_stack: (2, K_p, 128)  stacked zero-padded layer weights
      vecs:    (8, 128)       rows = [as1, ad1, b1, as2, ad2, b2, 0, 0]
    """
    f_in, f_hid = params["w1"].shape
    f_out = params["w2"].shape[1]

    kin_p = _round_up(f_in, 8)    # K padded to sublane multiple only (16), not 128
    khid_p = _round_up(f_hid, 8)  # 16
    k_p = max(kin_p, khid_p)
    f_p = LANE                    # lane-dense output-feature width

    w1_p = _pad2(params["w1"], k_p, f_p)
    w2_p = _pad2(params["w2"], k_p, f_p)
    w_stack = jnp.stack([w1_p, w2_p])                           # (2, 16, 128)

    rows = [params["as1"], params["ad1"], params["b1"],
            params["as2"], params["ad2"], params["b2"]]
    vecs = jnp.concatenate(
        [_pad2(r, 1, f_p) for r in rows] + [jnp.zeros((2, f_p), jnp.float32)],
        axis=0)                                                 # (8, 128) = one vreg tile

    mask_f32 = jnp.asarray(mask, jnp.float32)                   # raw 0/1 adjacency mask
    dims = dict(f_in=f_in, f_out=f_out, k_p=k_p, khid_p=khid_p, f_p=f_p)
    return mask_f32, w_stack, vecs, dims


def gat_forward(x, mask_f32, w_stack, vecs, dims):
    """Per-call path: one pad of x + one fused pallas_call + output lane slice."""
    n, f_in = x.shape
    k_p, khid_p, f_p, f_out = dims["k_p"], dims["khid_p"], dims["f_p"], dims["f_out"]
    x_p = jnp.pad(x.astype(jnp.float32), ((0, 0), (0, k_p - f_in)))   # (N, 16)

    kernel = functools.partial(gat_kernel, khid_p=khid_p, f_out=f_out)

    out_p = pl.pallas_call(
        kernel,
        out_shape=jax.ShapeDtypeStruct((n, f_p), jnp.float32),
        grid=(1,),
        in_specs=[
            pl.BlockSpec((n, k_p), lambda i: (0, 0)),           # x        (16, 16)
            pl.BlockSpec((n, n), lambda i: (0, 0)),             # mask     (16, 16)
            pl.BlockSpec((2, k_p, f_p), lambda i: (0, 0, 0)),   # weights  (2, 16, 128)
            pl.BlockSpec((8, f_p), lambda i: (0, 0)),           # packed vectors (8, 128)
        ],
        out_specs=pl.BlockSpec((n, f_p), lambda i: (0, 0)),
        compiler_params=pltpu.CompilerParams(
            dimension_semantics=("arbitrary",),
            vmem_limit_bytes=32 * 1024 * 1024,
        ),
    )(x_p, mask_f32, w_stack, vecs)

    return out_p[:, :f_out]            # drop padded lanes in the wrapper (free)


def gat_reference(x, mask, params):
    """Pure-JAX reference (exact math) for correctness checking."""
    def layer(h_in, w, a_s, a_d, b):
        h = h_in @ w
        asrc = jnp.sum(h * a_s, axis=-1)           # (N,)
        adst = jnp.sum(h * a_d, axis=-1)           # (N,)
        e = adst[:, None] + asrc[None, :]
        e = jnp.where(e > 0, e, 0.2 * e)
        e = jnp.where(mask > 0, e, -jnp.inf)
        att = jax.nn.softmax(e, axis=-1)
        return att @ h + b

    h1 = jnp.maximum(layer(x, params["w1"], params["as1"], params["ad1"], params["b1"]), 0.0)
    h2 = layer(h1, params["w2"], params["as2"], params["ad2"], params["b2"])
    return jax.nn.softmax(h2, axis=-1)


def init_params(key, f_in=14, f_hid=10, f_out=7):
    """Deterministic glorot-uniform init matching GATConv parameter shapes."""
    ks = jax.random.split(key, 6)

    def glorot(k, shape):
        lim = (6.0 / (shape[0] + shape[-1])) ** 0.5
        return jax.random.uniform(k, shape, jnp.float32, -lim, lim)

    return {
        "w1":  glorot(ks[0], (f_in, f_hid)),     # lin1 weight (transposed vs torch)
        "as1": glorot(ks[1], (1, f_hid)),        # att_src, heads=1
        "ad1": glorot(ks[2], (1, f_hid)),        # att_dst
        "b1":  jnp.zeros((1, f_hid), jnp.float32),
        "w2":  glorot(ks[3], (f_hid, f_out)),
        "as2": glorot(ks[4], (1, f_out)),
        "ad2": glorot(ks[5], (1, f_out)),
        "b2":  jnp.zeros((1, f_out), jnp.float32),
    }


if __name__ == "__main__":
    key = jax.random.PRNGKey(0)
    kx, ka, kp = jax.random.split(key, 3)

    n, f_in, f_hid, f_out = 16, 14, 10, 7
    x = jax.random.normal(kx, (n, f_in), dtype=jnp.float32)

    # Random sparse graph: adj[src, dst] = 1 with p=0.3 (matches scipy coo
    # row=src, col=dst convention of GatNet.adj_to_coo).
    adj = (jax.random.uniform(ka, (n, n)) < 0.3).astype(jnp.float32)
    # Dense attention mask: mask[i, j] = 1 iff edge j -> i; GATConv adds self loops,
    # so every row has at least one finite softmax entry.
    mask = jnp.maximum(jnp.transpose(adj), jnp.eye(n, dtype=jnp.float32))

    params = init_params(kp, f_in, f_hid, f_out)

    # Init-path prep (runs once; not part of the per-forward call path).
    mask_f32, w_stack, vecs, dims = prepare_inputs(params, mask)
    jax.block_until_ready((mask_f32, w_stack, vecs))

    out = gat_forward(x, mask_f32, w_stack, vecs, dims)
    out = jax.block_until_ready(out)
    ref = gat_reference(x, mask, params)

    assert out.shape == (n, f_out)
    assert bool(jnp.all(jnp.isfinite(out)))
    # exact final divide -> rows of the output softmax sum to 1 tightly
    assert bool(jnp.all(jnp.abs(jnp.sum(out, axis=1) - 1.0) < 1e-5))
    # match the exact-math reference (internal attn softmaxes use approx recip)
    assert float(jnp.max(jnp.abs(out - ref))) < 1e-2
    print("KERNEL_OK")
</pallas_src>

<mosaic_0001>
module attributes {stable_mosaic.version = 11 : i64} {
  func.func @gat_kernel(%arg0: i32, %arg1: memref<16x16xf32, #tpu.memory_space<vmem>>, %arg2: memref<16x16xf32, #tpu.memory_space<vmem>>, %arg3: memref<2x16x128xf32, #tpu.memory_space<vmem>>, %arg4: memref<8x128xf32, #tpu.memory_space<vmem>>, %arg5: memref<16x128xf32, #tpu.memory_space<vmem>>) attributes {dimension_semantics = [#tpu.dimension_semantics<arbitrary>], iteration_bounds = array<i64: 1>, scalar_prefetch = 0 : i64, scratch_operands = 0 : i64, tpu.core_type = #tpu.core_type<tc>, window_params = [{pipeline_mode = #tpu.pipeline_mode<synchronous>, transform_indices = @transform_0, window_bounds = array<i64: 16, 16>}, {pipeline_mode = #tpu.pipeline_mode<synchronous>, transform_indices = @transform_1, window_bounds = array<i64: 16, 16>}, {pipeline_mode = #tpu.pipeline_mode<synchronous>, transform_indices = @transform_2, window_bounds = array<i64: 2, 16, 128>}, {pipeline_mode = #tpu.pipeline_mode<synchronous>, transform_indices = @transform_3, window_bounds = array<i64: 8, 128>}, {pipeline_mode = #tpu.pipeline_mode<synchronous>, transform_indices = @transform_4, window_bounds = array<i64: 16, 128>}]} {
    %c0 = arith.constant 0 : index
    %c0_0 = arith.constant 0 : index
    %0 = vector.load %arg1[%c0, %c0_0] : memref<16x16xf32, #tpu.memory_space<vmem>>, vector<16x16xf32>
    %c0_1 = arith.constant 0 : index
    %c0_2 = arith.constant 0 : index
    %1 = vector.load %arg2[%c0_1, %c0_2] : memref<16x16xf32, #tpu.memory_space<vmem>>, vector<16x16xf32>
    %cst = arith.constant 0.000000e+00 : f32
    %2 = vector.broadcast %cst : f32 to vector<16x16xf32>
    %3 = arith.cmpf ogt, %1, %2 : vector<16x16xf32>
    %cst_3 = arith.constant 0.000000e+00 : f32
    %cst_4 = arith.constant -1.000000e+30 : f32
    %4 = vector.broadcast %cst_3 : f32 to vector<16x16xf32>
    %5 = vector.broadcast %cst_4 : f32 to vector<16x16xf32>
    %6 = arith.select %3, %4, %5 : vector<16x16xi1>, vector<16x16xf32>
    %c0_5 = arith.constant 0 : index
    %c0_6 = arith.constant 0 : index
    %c0_7 = arith.constant 0 : index
    %7 = vector.load %arg3[%c0_5, %c0_6, %c0_7] : memref<2x16x128xf32, #tpu.memory_space<vmem>>, vector<1x16x128xf32>
    %8 = vector.shape_cast %7 : vector<1x16x128xf32> to vector<16x128xf32>
    %c1 = arith.constant 1 : index
    %c0_8 = arith.constant 0 : index
    %c0_9 = arith.constant 0 : index
    %9 = vector.load %arg3[%c1, %c0_8, %c0_9] : memref<2x16x128xf32, #tpu.memory_space<vmem>>, vector<1x16x128xf32>
    %10 = vector.shape_cast %9 : vector<1x16x128xf32> to vector<16x128xf32>
    %c0_10 = arith.constant 0 : index
    %c0_11 = arith.constant 0 : index
    %11 = vector.load %arg4[%c0_10, %c0_11] : memref<8x128xf32, #tpu.memory_space<vmem>>, vector<1x128xf32>
    %c1_12 = arith.constant 1 : index
    %c0_13 = arith.constant 0 : index
    %12 = vector.load %arg4[%c1_12, %c0_13] : memref<8x128xf32, #tpu.memory_space<vmem>>, vector<1x128xf32>
    %c2 = arith.constant 2 : index
    %c0_14 = arith.constant 0 : index
    %13 = vector.load %arg4[%c2, %c0_14] : memref<8x128xf32, #tpu.memory_space<vmem>>, vector<1x128xf32>
    %c3 = arith.constant 3 : index
    %c0_15 = arith.constant 0 : index
    %14 = vector.load %arg4[%c3, %c0_15] : memref<8x128xf32, #tpu.memory_space<vmem>>, vector<1x128xf32>
    %c4 = arith.constant 4 : index
    %c0_16 = arith.constant 0 : index
    %15 = vector.load %arg4[%c4, %c0_16] : memref<8x128xf32, #tpu.memory_space<vmem>>, vector<1x128xf32>
    %c5 = arith.constant 5 : index
    %c0_17 = arith.constant 0 : index
    %16 = vector.load %arg4[%c5, %c0_17] : memref<8x128xf32, #tpu.memory_space<vmem>>, vector<1x128xf32>
    %cst_18 = arith.constant dense<0.000000e+00> : vector<16x128xf32>
    %17 = tpu.matmul %0, %8, %cst_18 {dimension_numbers = #tpu.dot_dimension_numbers<[1], [0], [0], [1], [0, 0, 1, 1], [], []>} : vector<16x16xf32>, vector<16x128xf32>, vector<16x128xf32> -> vector<16x128xf32>
    %18 = vector.broadcast %12 : vector<1x128xf32> to vector<16x128xf32>
    %19 = arith.mulf %17, %18 : vector<16x128xf32>
    %cst_19 = arith.constant dense<0.000000e+00> : vector<16xf32>
    %20 = vector.multi_reduction <add>, %19, %cst_19 [1] : vector<16x128xf32> to vector<16xf32>
    %21 = vector.shape_cast %20 : vector<16xf32> to vector<16x1xf32>
    %cst_20 = arith.constant dense<0.000000e+00> : vector<1x16xf32>
    %22 = tpu.matmul %11, %17, %cst_20 {dimension_numbers = #tpu.dot_dimension_numbers<[1], [1], [0], [0], [0, 0, 1, 0], [], []>} : vector<1x128xf32>, vector<16x128xf32>, vector<1x16xf32> -> vector<1x16xf32>
    %23 = vector.broadcast %21 : vector<16x1xf32> to vector<16x16xf32>
    %24 = vector.broadcast %22 : vector<1x16xf32> to vector<16x16xf32>
    %25 = arith.addf %23, %24 : vector<16x16xf32>
    %cst_21 = arith.constant 0.000000e+00 : f32
    %26 = vector.broadcast %cst_21 : f32 to vector<16x16xf32>
    %27 = arith.cmpf ogt, %25, %26 : vector<16x16xf32>
    %cst_22 = arith.constant 2.000000e-01 : f32
    %28 = vector.broadcast %cst_22 : f32 to vector<16x16xf32>
    %29 = arith.mulf %28, %25 : vector<16x16xf32>
    %30 = arith.select %27, %25, %29 : vector<16x16xi1>, vector<16x16xf32>
    %31 = arith.addf %30, %6 : vector<16x16xf32>
    %cst_23 = arith.constant dense<0xFF800000> : vector<16xf32>
    %32 = vector.multi_reduction <maximumf>, %31, %cst_23 [1] : vector<16x16xf32> to vector<16xf32>
    %33 = vector.shape_cast %32 : vector<16xf32> to vector<16x1xf32>
    %34 = vector.broadcast %33 : vector<16x1xf32> to vector<16x16xf32>
    %35 = arith.subf %31, %34 : vector<16x16xf32>
    %36 = math.exp %35 : vector<16x16xf32>
    %cst_24 = arith.constant dense<0.000000e+00> : vector<16xf32>
    %37 = vector.multi_reduction <add>, %36, %cst_24 [1] : vector<16x16xf32> to vector<16xf32>
    %38 = vector.shape_cast %37 : vector<16xf32> to vector<16x1xf32>
    %39 = tpu.reciprocal %38 {approx = true} : vector<16x1xf32> -> vector<16x1xf32>
    %40 = vector.broadcast %39 : vector<16x1xf32> to vector<16x16xf32>
    %41 = arith.mulf %36, %40 : vector<16x16xf32>
    %cst_25 = arith.constant dense<0.000000e+00> : vector<16x128xf32>
    %42 = tpu.matmul %41, %17, %cst_25 {dimension_numbers = #tpu.dot_dimension_numbers<[1], [0], [0], [1], [0, 0, 1, 1], [], []>} : vector<16x16xf32>, vector<16x128xf32>, vector<16x128xf32> -> vector<16x128xf32>
    %43 = vector.broadcast %13 : vector<1x128xf32> to vector<16x128xf32>
    %44 = arith.addf %42, %43 : vector<16x128xf32>
    %cst_26 = arith.constant 0.000000e+00 : f32
    %45 = vector.broadcast %cst_26 : f32 to vector<16x128xf32>
    %46 = arith.maximumf %44, %45 : vector<16x128xf32>
    %47 = vector.extract_strided_slice %46 {offsets = [0, 0], sizes = [16, 16], strides = [1, 1]} : vector<16x128xf32> to vector<16x16xf32>
    %cst_27 = arith.constant dense<0.000000e+00> : vector<16x128xf32>
    %48 = tpu.matmul %47, %10, %cst_27 {dimension_numbers = #tpu.dot_dimension_numbers<[1], [0], [0], [1], [0, 0, 1, 1], [], []>} : vector<16x16xf32>, vector<16x128xf32>, vector<16x128xf32> -> vector<16x128xf32>
    %49 = vector.broadcast %15 : vector<1x128xf32> to vector<16x128xf32>
    %50 = arith.mulf %48, %49 : vector<16x128xf32>
    %cst_28 = arith.constant dense<0.000000e+00> : vector<16xf32>
    %51 = vector.multi_reduction <add>, %50, %cst_28 [1] : vector<16x128xf32> to vector<16xf32>
    %52 = vector.shape_cast %51 : vector<16xf32> to vector<16x1xf32>
    %cst_29 = arith.constant dense<0.000000e+00> : vector<1x16xf32>
    %53 = tpu.matmul %14, %48, %cst_29 {dimension_numbers = #tpu.dot_dimension_numbers<[1], [1], [0], [0], [0, 0, 1, 0], [], []>} : vector<1x128xf32>, vector<16x128xf32>, vector<1x16xf32> -> vector<1x16xf32>
    %54 = vector.broadcast %52 : vector<16x1xf32> to vector<16x16xf32>
    %55 = vector.broadcast %53 : vector<1x16xf32> to vector<16x16xf32>
    %56 = arith.addf %54, %55 : vector<16x16xf32>
    %cst_30 = arith.constant 0.000000e+00 : f32
    %57 = vector.broadcast %cst_30 : f32 to vector<16x16xf32>
    %58 = arith.cmpf ogt, %56, %57 : vector<16x16xf32>
    %cst_31 = arith.constant 2.000000e-01 : f32
    %59 = vector.broadcast %cst_31 : f32 to vector<16x16xf32>
    %60 = arith.mulf %59, %56 : vector<16x16xf32>
    %61 = arith.select %58, %56, %60 : vector<16x16xi1>, vector<16x16xf32>
    %62 = arith.addf %61, %6 : vector<16x16xf32>
    %cst_32 = arith.constant dense<0xFF800000> : vector<16xf32>
    %63 = vector.multi_reduction <maximumf>, %62, %cst_32 [1] : vector<16x16xf32> to vector<16xf32>
    %64 = vector.shape_cast %63 : vector<16xf32> to vector<16x1xf32>
    %65 = vector.broadcast %64 : vector<16x1xf32> to vector<16x16xf32>
    %66 = arith.subf %62, %65 : vector<16x16xf32>
    %67 = math.exp %66 : vector<16x16xf32>
    %cst_33 = arith.constant dense<0.000000e+00> : vector<16xf32>
    %68 = vector.multi_reduction <add>, %67, %cst_33 [1] : vector<16x16xf32> to vector<16xf32>
    %69 = vector.shape_cast %68 : vector<16xf32> to vector<16x1xf32>
    %70 = tpu.reciprocal %69 {approx = true} : vector<16x1xf32> -> vector<16x1xf32>
    %71 = vector.broadcast %70 : vector<16x1xf32> to vector<16x16xf32>
    %72 = arith.mulf %67, %71 : vector<16x16xf32>
    %cst_34 = arith.constant dense<0.000000e+00> : vector<16x128xf32>
    %73 = tpu.matmul %72, %48, %cst_34 {dimension_numbers = #tpu.dot_dimension_numbers<[1], [0], [0], [1], [0, 0, 1, 1], [], []>} : vector<16x16xf32>, vector<16x128xf32>, vector<16x128xf32> -> vector<16x128xf32>
    %74 = vector.broadcast %16 : vector<1x128xf32> to vector<16x128xf32>
    %75 = arith.addf %73, %74 : vector<16x128xf32>
    %76 = tpu.iota {dimensions = array<i32: 1>} : vector<16x128xi32>
    %c7_i32 = arith.constant 7 : i32
    %77 = vector.broadcast %c7_i32 : i32 to vector<16x128xi32>
    %78 = arith.cmpi slt, %76, %77 : vector<16x128xi32>
    %cst_35 = arith.constant -1.000000e+30 : f32
    %79 = vector.broadcast %cst_35 : f32 to vector<16x128xf32>
    %80 = arith.select %78, %75, %79 : vector<16x128xi1>, vector<16x128xf32>
    %cst_36 = arith.constant dense<0xFF800000> : vector<16xf32>
    %81 = vector.multi_reduction <maximumf>, %80, %cst_36 [1] : vector<16x128xf32> to vector<16xf32>
    %82 = vector.shape_cast %81 : vector<16xf32> to vector<16x1xf32>
    %83 = vector.broadcast %82 : vector<16x1xf32> to vector<16x128xf32>
    %84 = arith.subf %80, %83 : vector<16x128xf32>
    %85 = math.exp %84 : vector<16x128xf32>
    %cst_37 = arith.constant dense<0.000000e+00> : vector<16xf32>
    %86 = vector.multi_reduction <add>, %85, %cst_37 [1] : vector<16x128xf32> to vector<16xf32>
    %87 = vector.shape_cast %86 : vector<16xf32> to vector<16x1xf32>
    %88 = vector.broadcast %87 : vector<16x1xf32> to vector<16x128xf32>
    %89 = arith.divf %85, %88 : vector<16x128xf32>
    %c0_38 = arith.constant 0 : index
    %c0_39 = arith.constant 0 : index
    %90 = vector.load %arg5[%c0_38, %c0_39] : memref<16x128xf32, #tpu.memory_space<vmem>>, vector<16x128xf32>
    tpu.vector_store %arg5[%c0_38, %c0_39], %89 {strides = array<i32>} : memref<16x128xf32, #tpu.memory_space<vmem>>, vector<16x128xf32>,
    return
  }
  func.func @transform_0(%arg0: i32) -> (i32, i32) {
    %c0_i32 = arith.constant 0 : i32
    %c0_i32_0 = arith.constant 0 : i32
    %c0_i32_1 = arith.constant 0 : i32
    return %c0_i32, %c0_i32_0 : i32, i32
  }
  func.func @transform_1(%arg0: i32) -> (i32, i32) {
    %c0_i32 = arith.constant 0 : i32
    %c0_i32_0 = arith.constant 0 : i32
    %c0_i32_1 = arith.constant 0 : i32
    return %c0_i32, %c0_i32_0 : i32, i32
  }
  func.func @transform_2(%arg0: i32) -> (i32, i32, i32) {
    %c0_i32 = arith.constant 0 : i32
    %c0_i32_0 = arith.constant 0 : i32
    %c0_i32_1 = arith.constant 0 : i32
    %c0_i32_2 = arith.constant 0 : i32
    return %c0_i32, %c0_i32_0, %c0_i32_1 : i32, i32, i32
  }
  func.func @transform_3(%arg0: i32) -> (i32, i32) {
    %c0_i32 = arith.constant 0 : i32
    %c0_i32_0 = arith.constant 0 : i32
    %c0_i32_1 = arith.constant 0 : i32
    return %c0_i32, %c0_i32_0 : i32, i32
  }
  func.func @transform_4(%arg0: i32) -> (i32, i32) {
    %c0_i32 = arith.constant 0 : i32
    %c0_i32_0 = arith.constant 0 : i32
    %c0_i32_1 = arith.constant 0 : i32
    return %c0_i32, %c0_i32_0 : i32, i32
  }
}

</mosaic_0001>

<llo_original>
// kernel: tpu_custom_call.1
$region0: #{tpu_custom_call.1}
  #allocation0 [shape = 'u32[]', space=smem, size = 0x4, offset = 0x4, fixed_abs, tag = 'smem constant byte address 0x4 - core index']
  #allocation1 [shape = 'u32[144,128]{1,0:T(1,128)}', space=vmem, size = 0x12000, scoped, tag = 'internal scratch']
  %s0 = inlined_call_operand.hbm [shape: f32[16,16], index: 0, kind: input, shape index: {}]
  %s1 = inlined_call_operand.hbm [shape: f32[16,16], index: 1, kind: input, shape index: {}]
  %s2 = inlined_call_operand.hbm [shape: f32[2,16,128], index: 2, kind: input, shape index: {}]
  %s3 = inlined_call_operand.vmem [shape: f32[8,128], index: 3, kind: input, shape index: {}]
  %s4 = inlined_call_operand.hbm [shape: f32[16,128], index: 4, kind: output, shape index: {}]
  %s5 = sld [smem:[#allocation0]]
  $region38: #{tpu_custom_call.1} parent=0
    _
  %s7 = ssub.s32 1, %s5
  %s8 = scalar_select 0, %s7, %s5
  $region1: #{tpu_custom_call.1} parent=0
    #allocation2 [shape = 'u8[8192]{0}', space=vmem, size = 0x2000, scoped, tag = 'input window, operand 0, single buffered']
    #allocation3 [shape = 's32[1]{0}', space=sflag, size = 0x4, scoped, tag = 'scoped memory for tpu_custom_call.1']
    #allocation4 [shape = 's32[1]{0}', space=sflag, size = 0x4, scoped, tag = 'scoped memory for tpu_custom_call.1']
    #allocation5 [shape = 'u8[8192]{0}', space=vmem, size = 0x2000, scoped, tag = 'input window, operand 1, single buffered']
    #allocation6 [shape = 's32[1]{0}', space=sflag, size = 0x4, scoped, tag = 'scoped memory for tpu_custom_call.1']
    #allocation7 [shape = 'u8[16384]{0}', space=vmem, size = 0x4000, scoped, tag = 'input window, operand 2, single buffered']
    #allocation8 [shape = 'u8[8192]{0}', space=vmem, size = 0x2000, scoped, tag = 'output window, operand 0, single buffered']
    %9 = vsyncpa [#allocation3], 0
    %10 = vsyncpa [#allocation6], 0
    %11 = vsyncpa [#allocation4], 0
    // Predicated region
    $region2: #{tpu_custom_call.1} parent=1 // pred_check
      _
    $region3: #{tpu_custom_call.1} parent=1 // pred_check_branch
      %13 = sbr.rel (0) target = $region5
    $region4: #{tpu_custom_call.1} parent=1 // pred_region
      %s15 = ssub.s32 256, 256
      %16 = vsyncadd [#allocation3], %s15
      %s17 = sshll.u32 [#allocation2], 4
      %s18 = int_to_ptr.vmem [resolvable:$true] %s17
      %23 = dma.hbm_to_vmem [thread:$0]  %s0, 256, %s18, [#allocation3], 128, 128, 8
    $region5: #{tpu_custom_call.1} parent=1 // pred_fallthru
      _
    // Predicated region
    $region6: #{tpu_custom_call.1} parent=1 // pred_check
      _
    $region7: #{tpu_custom_call.1} parent=1 // pred_check_branch
      %25 = sbr.rel (0) target = $region9
    $region8: #{tpu_custom_call.1} parent=1 // pred_region
      %s27 = ssub.s32 256, 256
      %28 = vsyncadd [#allocation6], %s27
      %s29 = sshll.u32 [#allocation5], 4
      %s30 = int_to_ptr.vmem [resolvable:$true] %s29
      %35 = dma.hbm_to_vmem [thread:$0]  %s1, 256, %s30, [#allocation6], 128, 128, 8
    $region9: #{tpu_custom_call.1} parent=1 // pred_fallthru
      _
    // Predicated region
    $region10: #{tpu_custom_call.1} parent=1 // pred_check
      _
    $region11: #{tpu_custom_call.1} parent=1 // pred_check_branch
      %37 = sbr.rel (0) target = $region13
    $region12: #{tpu_custom_call.1} parent=1 // pred_region
      %s39 = ssub.s32 512, 512
      %40 = vsyncadd [#allocation6], %s39
      %s41 = sshll.u32 [#allocation7], 4
      %s42 = int_to_ptr.vmem [resolvable:$true] %s41
      %47 = dma.hbm_to_vmem [thread:$0]  %s2, 512, %s42, [#allocation6], 128, 128, 8
    $region13: #{tpu_custom_call.1} parent=1 // pred_fallthru
      _
    // Predicated region
    $region14: #{tpu_custom_call.1} parent=1 // pred_check
      _
    $region15: #{tpu_custom_call.1} parent=1 // pred_check_branch
      %49 = sbr.rel (0) target = $region17
    $region16: #{tpu_custom_call.1} parent=1 // pred_region
      _
    $region17: #{tpu_custom_call.1} parent=1 // pred_fallthru
      _
    // Predicated region
    $region18: #{tpu_custom_call.1} parent=1 // pred_check
      _
    $region19: #{tpu_custom_call.1} parent=1 // pred_check_branch
      %51 = sbr.rel (0) target = $region21
    $region20: #{tpu_custom_call.1} parent=1 // pred_region
      %52 = dma.done [#allocation3], 256
    $region21: #{tpu_custom_call.1} parent=1 // pred_fallthru
      _
    // Predicated region
    $region22: #{tpu_custom_call.1} parent=1 // pred_check
      _
    $region23: #{tpu_custom_call.1} parent=1 // pred_check_branch
      %54 = sbr.rel (0) target = $region25
    $region24: #{tpu_custom_call.1} parent=1 // pred_region
      %55 = dma.done [#allocation6], 256
    $region25: #{tpu_custom_call.1} parent=1 // pred_fallthru
      _
    // Predicated region
    $region26: #{tpu_custom_call.1} parent=1 // pred_check
      _
    $region27: #{tpu_custom_call.1} parent=1 // pred_check_branch
      %57 = sbr.rel (0) target = $region29
    $region28: #{tpu_custom_call.1} parent=1 // pred_region
      %58 = dma.done [#allocation6], 512
    $region29: #{tpu_custom_call.1} parent=1 // pred_fallthru
      _
    %v59 = vld [vmem:[#allocation2] sm:$0xff]
    %v60 = vld [vmem:[#allocation2 + $0x8] sm:$0xff]
    %v61 = vld [vmem:[#allocation5] sm:$0xff]
    %v62 = vld [vmem:[#allocation5 + $0x8] sm:$0xff]
    %vm63 = vcmp.gt.f32.partialorder %v61, 0.0
    %vm64 = vcmp.gt.f32.partialorder %v62, 0.0
    %v65 = vsel %vm63, 0.0, -1e+30
    %v66 = vsel %vm64, 0.0, -1e+30
    %v67 = vld [vmem:[#allocation7] sm:$0xff]
    %v68 = vld [vmem:[#allocation7 + $0x8] sm:$0xff]
    %s69 = scalar_lea.vmem [#allocation7], 16
    %v70 = vld [vmem:[%s69] sm:$0xff]
    %v71 = vld [vmem:[%s69 + $0x8] sm:$0xff]
    %v72 = vld [vmem:[%s3] sm:$0x1]
    %v73 = vld [vmem:[%s3 + $0x1] sm:$0x1]
    %v74 = vld [vmem:[%s3 + $0x2] sm:$0x1]
    %v75 = vld [vmem:[%s3 + $0x3] sm:$0x1]
    %v76 = vld [vmem:[%s3 + $0x4] sm:$0x1]
    %v77 = vld [vmem:[%s3 + $0x5] sm:$0x1]
    %vm78 = vcmask 130048
    %v80 = vsel %vm78, %v59, 0
    %v83 = vsel %vm78, %v60, 0
    %85 = vmatprep.subr.mxu0 0.0
    %86 = vmatpush1.msra.mxu0 %v67
    %87 = vmatprep.subr.mxu0 0.0
    %88 = vmatpush1.msra.mxu0 %v68
    %89 = vmatprep.subr.mxu0 0.0
    %90 = vmatpush1.msra.mxu0 0.0
    %91 = vmatprep.subr.mxu0 0.0
    %92 = vmatpush1.msra.mxu0 0.0
    %93 = vmatprep.subr.mxu0 0.0
    %94 = vmatpush1.msra.mxu0 0.0
    %95 = vmatprep.subr.mxu0 0.0
    %96 = vmatpush1.msra.mxu0 0.0
    %97 = vmatprep.subr.mxu0 0.0
    %98 = vmatpush1.msra.mxu0 0.0
    %99 = vmatprep.subr.mxu0 0.0
    %100 = vmatpush1.msra.mxu0 0.0
    %101 = vmatprep.subr.mxu0 0.0
    %102 = vmatpush1.msra.mxu0 0.0
    %103 = vmatprep.subr.mxu0 0.0
    %104 = vmatpush1.msra.mxu0 0.0
    %105 = vmatprep.subr.mxu0 0.0
    %106 = vmatpush1.msra.mxu0 0.0
    %107 = vmatprep.subr.mxu0 0.0
    %108 = vmatpush1.msra.mxu0 0.0
    %109 = vmatprep.subr.mxu0 0.0
    %110 = vmatpush1.msra.mxu0 0.0
    %111 = vmatprep.subr.mxu0 0.0
    %112 = vmatpush1.msra.mxu0 0.0
    %113 = vmatprep.subr.mxu0 0.0
    %114 = vmatpush1.msra.mxu0 0.0
    %115 = vmatprep.subr.mxu0 0.0
    %116 = vmatpush1.msra.mxu0 0.0
    %117 = vmatprep.subr.mxu0 0.0
    %118 = vmatpush1.msra.mxu0 0.0
    %119 = vmatprep.subr.mxu0 0.0
    %120 = vmatpush1.msra.mxu0 0.0
    %121 = vmatprep.subr.mxu0 0.0
    %122 = vmatpush1.msra.mxu0 0.0
    %123 = vmatprep.subr.mxu0 0.0
    %124 = vmatpush1.msra.mxu0 0.0
    %125 = vmatprep.subr.mxu0 0.0
    %126 = vmatpush1.msra.mxu0 0.0
    %127 = vmatprep.subr.mxu0 0.0
    %128 = vmatpush1.msra.mxu0 0.0
    %129 = vmatprep.subr.mxu0 0.0
    %130 = vmatpush1.msra.mxu0 0.0
    %131 = vmatprep.subr.mxu0 0.0
    %132 = vmatpush1.msra.mxu0 0.0
    %133 = vmatprep.subr.mxu0 0.0
    %134 = vmatpush1.msra.mxu0 0.0
    %135 = vmatprep.subr.mxu0 0.0
    %136 = vmatpush1.msra.mxu0 0.0
    %137 = vmatprep.subr.mxu0 0.0
    %138 = vmatpush1.msra.mxu0 0.0
    %139 = vmatprep.subr.mxu0 0.0
    %140 = vmatpush1.msra.mxu0 0.0
    %141 = vmatprep.subr.mxu0 0.0
    %142 = vmatpush1.msra.mxu0 0.0
    %143 = vmatprep.subr.mxu0 0.0
    %144 = vmatpush1.msra.mxu0 0.0
    %145 = vmatprep.subr.mxu0 0.0
    %146 = vmatpush1.msra.mxu0 0.0
    %147 = vmatprep.subr.mxu0 0.0
    %148 = vmatpush1.msra.mxu0 0.0
    %149 = vmatprep.mubr.f32.mxu0 0.0
    %150 = vmatmul.mubr.f32.gmra.mrb[0].mxu0 %v80
    %v151 = vpop.f32.mrb[0].mxu0
    %v152 = vadd.f32 0.0, %v151
    %v153 = vpop.f32.mrb[0].mxu0
    %154 = vmatprep.mubr.f32.mxu0 0.0
    %155 = vmatmul.mubr.f32.gmra.mrb[0].mxu0 %v83
    %v156 = vpop.f32.mrb[0].mxu0
    %v157 = vadd.f32 0.0, %v156
    %v158 = vpop.f32.mrb[0].mxu0
    %159 = vdwg.mxu0
    %v160 = vlaneseq
    %v161 = vshrl.u32 %v160, 7
    %v162 = vsub.s32 0, %v161
    %v163 = vrot.slane %v73, %v162
    %v164 = vmul.f32 %v152, %v163
    %v165 = vmul.f32 %v157, %v163
    %166 = vadd.xlane.f32.xlu0 %v164
    %v167 = vpop.xlane.xlu0 %166
    %168 = vadd.xlane.f32.xlu0 %v165
    %v169 = vpop.xlane.xlu0 %168
    %170 = vmatprep.subr.mxu0 0.0
    %171 = vmatpush1.xpose.msra.mxu0 %v152
    %172 = vmatprep.subr.mxu0 0.0
    %173 = vmatpush1.xpose.msra.mxu0 %v157
    %174 = vmatprep.subr.mxu0 0.0
    %175 = vmatpush1.xpose.msra.mxu0 0.0
    %176 = vmatprep.subr.mxu0 0.0
    %177 = vmatpush1.xpose.msra.mxu0 0.0
    %178 = vmatprep.subr.mxu0 0.0
    %179 = vmatpush1.xpose.msra.mxu0 0.0
    %180 = vmatprep.subr.mxu0 0.0
    %181 = vmatpush1.xpose.msra.mxu0 0.0
    %182 = vmatprep.subr.mxu0 0.0
    %183 = vmatpush1.xpose.msra.mxu0 0.0
    %184 = vmatprep.subr.mxu0 0.0
    %185 = vmatpush1.xpose.msra.mxu0 0.0
    %186 = vmatprep.subr.mxu0 0.0
    %187 = vmatpush1.xpose.msra.mxu0 0.0
    %188 = vmatprep.subr.mxu0 0.0
    %189 = vmatpush1.xpose.msra.mxu0 0.0
    %190 = vmatprep.subr.mxu0 0.0
    %191 = vmatpush1.xpose.msra.mxu0 0.0
    %192 = vmatprep.subr.mxu0 0.0
    %193 = vmatpush1.xpose.msra.mxu0 0.0
    %194 = vmatprep.subr.mxu0 0.0
    %195 = vmatpush1.xpose.msra.mxu0 0.0
    %196 = vmatprep.subr.mxu0 0.0
    %197 = vmatpush1.xpose.msra.mxu0 0.0
    %198 = vmatprep.subr.mxu0 0.0
    %199 = vmatpush1.xpose.msra.mxu0 0.0
    %200 = vmatprep.subr.mxu0 0.0
    %201 = vmatpush1.xpose.msra.mxu0 0.0
    %202 = vmatprep.subr.mxu0 0.0
    %203 = vmatpush1.xpose.msra.mxu0 0.0
    %204 = vmatprep.subr.mxu0 0.0
    %205 = vmatpush1.xpose.msra.mxu0 0.0
    %206 = vmatprep.subr.mxu0 0.0
    %207 = vmatpush1.xpose.msra.mxu0 0.0
    %208 = vmatprep.subr.mxu0 0.0
    %209 = vmatpush1.xpose.msra.mxu0 0.0
    %210 = vmatprep.subr.mxu0 0.0
    %211 = vmatpush1.xpose.msra.mxu0 0.0
    %212 = vmatprep.subr.mxu0 0.0
    %213 = vmatpush1.xpose.msra.mxu0 0.0
    %214 = vmatprep.subr.mxu0 0.0
    %215 = vmatpush1.xpose.msra.mxu0 0.0
    %216 = vmatprep.subr.mxu0 0.0
    %217 = vmatpush1.xpose.msra.mxu0 0.0
    %218 = vmatprep.subr.mxu0 0.0
    %219 = vmatpush1.xpose.msra.mxu0 0.0
    %220 = vmatprep.subr.mxu0 0.0
    %221 = vmatpush1.xpose.msra.mxu0 0.0
    %222 = vmatprep.subr.mxu0 0.0
    %223 = vmatpush1.xpose.msra.mxu0 0.0
    %224 = vmatprep.subr.mxu0 0.0
    %225 = vmatpush1.xpose.msra.mxu0 0.0
    %226 = vmatprep.subr.mxu0 0.0
    %227 = vmatpush1.xpose.msra.mxu0 0.0
    %228 = vmatprep.subr.mxu0 0.0
    %229 = vmatpush1.xpose.msra.mxu0 0.0
    %230 = vmatprep.subr.mxu0 0.0
    %231 = vmatpush1.xpose.msra.mxu0 0.0
    %232 = vmatprep.subr.mxu0 0.0
    %233 = vmatpush1.xpose.msra.mxu0 0.0
    %234 = vmatprep.mubr.f32.mxu0 0.0
    %235 = vmatmul.mubr.f32.gmra.mrb[0].mxu0 %v72
    %v236 = vpop.f32.mrb[0].mxu0
    %v237 = vadd.f32 0.0, %v236
    %v238 = vpop.f32.mrb[0].mxu0
    %239 = vdwg.mxu0
    %v240 = vlaneseq
    %v241 = vshrl.u32 %v240, 7
    %v242 = vsub.s32 0, %v241
    %v243 = vrot.slane %v237, %v242
    %v244 = vadd.f32 %v167, %v243
    %v245 = vadd.f32 %v169, %v243
    %vm246 = vcmp.gt.f32.partialorder %v244, 0.0
    %vm247 = vcmp.gt.f32.partialorder %v245, 0.0
    %v248 = vmul.f32 %v244, 0.2
    %v249 = vmul.f32 %v245, 0.2
    %v250 = vsel %vm246, %v244, %v248
    %v251 = vsel %vm247, %v245, %v249
    %v252 = vadd.f32 %v250, %v65
    %v253 = vadd.f32 %v251, %v66
    %v254 = vsel %vm78, %v252, -inf
    %255 = vmax.xlane.f32.xlu0 %v254
    %v256 = vpop.xlane.xlu0 %255
    %v257 = vsel %vm78, %v253, -inf
    %258 = vmax.xlane.f32.xlu0 %v257
    %v259 = vpop.xlane.xlu0 %258
    %v260 = vsub.f32 %v252, %v256
    %v261 = vsub.f32 %v253, %v259
    %v262 = vmul.f32 %v260, 1.442695
    %v263 = vpow.pop %v262
    %v264 = vmul.f32 %v261, 1.442695
    %v265 = vpow.pop %v264
    %v266 = vsel %vm78, %v263, 0.0
    %267 = vadd.xlane.f32.xlu0 %v266
    %v268 = vpop.xlane.xlu0 %267
    %v269 = vsel %vm78, %v265, 0.0
    %270 = vadd.xlane.f32.xlu0 %v269
    %v271 = vpop.xlane.xlu0 %270
    %v272 = vrcp.pop %v268
    %v273 = vrcp.pop %v271
    %v274 = vmul.f32 %v263, %v272
    %v275 = vmul.f32 %v265, %v273
    %v276 = vlaneseq
    %v277 = vshrl.u32 %v276, 7
    %v278 = vsub.s32 0, %v277
    %v279 = vrot.slane %v74, %v278
    %v281 = vsel %vm78, %v274, 0
    %v284 = vsel %vm78, %v275, 0
    %286 = vmatprep.subr.mxu0 0.0
    %287 = vmatpush1.msra.mxu0 %v152
    %288 = vmatprep.subr.mxu0 0.0
    %289 = vmatpush1.msra.mxu0 %v157
    %290 = vmatprep.subr.mxu0 0.0
    %291 = vmatpush1.msra.mxu0 0.0
    %292 = vmatprep.subr.mxu0 0.0
    %293 = vmatpush1.msra.mxu0 0.0
    %294 = vmatprep.subr.mxu0 0.0
    %295 = vmatpush1.msra.mxu0 0.0
    %296 = vmatprep.subr.mxu0 0.0
    %297 = vmatpush1.msra.mxu0 0.0
    %298 = vmatprep.subr.mxu0 0.0
    %299 = vmatpush1.msra.mxu0 0.0
    %300 = vmatprep.subr.mxu0 0.0
    %301 = vmatpush1.msra.mxu0 0.0
    %302 = vmatprep.subr.mxu0 0.0
    %303 = vmatpush1.msra.mxu0 0.0
    %304 = vmatprep.subr.mxu0 0.0
    %305 = vmatpush1.msra.mxu0 0.0
    %306 = vmatprep.subr.mxu0 0.0
    %307 = vmatpush1.msra.mxu0 0.0
    %308 = vmatprep.subr.mxu0 0.0
    %309 = vmatpush1.msra.mxu0 0.0
    %310 = vmatprep.subr.mxu0 0.0
    %311 = vmatpush1.msra.mxu0 0.0
    %312 = vmatprep.subr.mxu0 0.0
    %313 = vmatpush1.msra.mxu0 0.0
    %314 = vmatprep.subr.mxu0 0.0
    %315 = vmatpush1.msra.mxu0 0.0
    %316 = vmatprep.subr.mxu0 0.0
    %317 = vmatpush1.msra.mxu0 0.0
    %318 = vmatprep.subr.mxu0 0.0
    %319 = vmatpush1.msra.mxu0 0.0
    %320 = vmatprep.subr.mxu0 0.0
    %321 = vmatpush1.msra.mxu0 0.0
    %322 = vmatprep.subr.mxu0 0.0
    %323 = vmatpush1.msra.mxu0 0.0
    %324 = vmatprep.subr.mxu0 0.0
    %325 = vmatpush1.msra.mxu0 0.0
    %326 = vmatprep.subr.mxu0 0.0
    %327 = vmatpush1.msra.mxu0 0.0
    %328 = vmatprep.subr.mxu0 0.0
    %329 = vmatpush1.msra.mxu0 0.0
    %330 = vmatprep.subr.mxu0 0.0
    %331 = vmatpush1.msra.mxu0 0.0
    %332 = vmatprep.subr.mxu0 0.0
    %333 = vmatpush1.msra.mxu0 0.0
    %334 = vmatprep.subr.mxu0 0.0
    %335 = vmatpush1.msra.mxu0 0.0
    %336 = vmatprep.subr.mxu0 0.0
    %337 = vmatpush1.msra.mxu0 0.0
    %338 = vmatprep.subr.mxu0 0.0
    %339 = vmatpush1.msra.mxu0 0.0
    %340 = vmatprep.subr.mxu0 0.0
    %341 = vmatpush1.msra.mxu0 0.0
    %342 = vmatprep.subr.mxu0 0.0
    %343 = vmatpush1.msra.mxu0 0.0
    %344 = vmatprep.subr.mxu0 0.0
    %345 = vmatpush1.msra.mxu0 0.0
    %346 = vmatprep.subr.mxu0 0.0
    %347 = vmatpush1.msra.mxu0 0.0
    %348 = vmatprep.subr.mxu0 0.0
    %349 = vmatpush1.msra.mxu0 0.0
    %350 = vmatprep.mubr.f32.mxu0 0.0
    %351 = vmatmul.mubr.f32.gmra.mrb[0].mxu0 %v281
    %v352 = vpop.f32.mrb[0].mxu0
    %v353 = vadd.f32 %v279, %v352
    %v354 = vpop.f32.mrb[0].mxu0
    %355 = vmatprep.mubr.f32.mxu0 0.0
    %356 = vmatmul.mubr.f32.gmra.mrb[0].mxu0 %v284
    %v357 = vpop.f32.mrb[0].mxu0
    %v358 = vadd.f32 %v279, %v357
    %v359 = vpop.f32.mrb[0].mxu0
    %360 = vdwg.mxu0
    %v361 = vmax.f32 %v353, 0.0
    %v362 = vmax.f32 %v358, 0.0
    %v364 = vsel %vm78, %v361, 0
    %v367 = vsel %vm78, %v362, 0
    %369 = vmatprep.subr.mxu0 0.0
    %370 = vmatpush1.msra.mxu0 %v70
    %371 = vmatprep.subr.mxu0 0.0
    %372 = vmatpush1.msra.mxu0 %v71
    %373 = vmatprep.subr.mxu0 0.0
    %374 = vmatpush1.msra.mxu0 0.0
    %375 = vmatprep.subr.mxu0 0.0
    %376 = vmatpush1.msra.mxu0 0.0
    %377 = vmatprep.subr.mxu0 0.0
    %378 = vmatpush1.msra.mxu0 0.0
    %379 = vmatprep.subr.mxu0 0.0
    %380 = vmatpush1.msra.mxu0 0.0
    %381 = vmatprep.subr.mxu0 0.0
    %382 = vmatpush1.msra.mxu0 0.0
    %383 = vmatprep.subr.mxu0 0.0
    %384 = vmatpush1.msra.mxu0 0.0
    %385 = vmatprep.subr.mxu0 0.0
    %386 = vmatpush1.msra.mxu0 0.0
    %387 = vmatprep.subr.mxu0 0.0
    %388 = vmatpush1.msra.mxu0 0.0
    %389 = vmatprep.subr.mxu0 0.0
    %390 = vmatpush1.msra.mxu0 0.0
    %391 = vmatprep.subr.mxu0 0.0
    %392 = vmatpush1.msra.mxu0 0.0
    %393 = vmatprep.subr.mxu0 0.0
    %394 = vmatpush1.msra.mxu0 0.0
    %395 = vmatprep.subr.mxu0 0.0
    %396 = vmatpush1.msra.mxu0 0.0
    %397 = vmatprep.subr.mxu0 0.0
    %398 = vmatpush1.msra.mxu0 0.0
    %399 = vmatprep.subr.mxu0 0.0
    %400 = vmatpush1.msra.mxu0 0.0
    %401 = vmatprep.subr.mxu0 0.0
    %402 = vmatpush1.msra.mxu0 0.0
    %403 = vmatprep.subr.mxu0 0.0
    %404 = vmatpush1.msra.mxu0 0.0
    %405 = vmatprep.subr.mxu0 0.0
    %406 = vmatpush1.msra.mxu0 0.0
    %407 = vmatprep.subr.mxu0 0.0
    %408 = vmatpush1.msra.mxu0 0.0
    %409 = vmatprep.subr.mxu0 0.0
    %410 = vmatpush1.msra.mxu0 0.0
    %411 = vmatprep.subr.mxu0 0.0
    %412 = vmatpush1.msra.mxu0 0.0
    %413 = vmatprep.subr.mxu0 0.0
    %414 = vmatpush1.msra.mxu0 0.0
    %415 = vmatprep.subr.mxu0 0.0
    %416 = vmatpush1.msra.mxu0 0.0
    %417 = vmatprep.subr.mxu0 0.0
    %418 = vmatpush1.msra.mxu0 0.0
    %419 = vmatprep.subr.mxu0 0.0
    %420 = vmatpush1.msra.mxu0 0.0
    %421 = vmatprep.subr.mxu0 0.0
    %422 = vmatpush1.msra.mxu0 0.0
    %423 = vmatprep.subr.mxu0 0.0
    %424 = vmatpush1.msra.mxu0 0.0
    %425 = vmatprep.subr.mxu0 0.0
    %426 = vmatpush1.msra.mxu0 0.0
    %427 = vmatprep.subr.mxu0 0.0
    %428 = vmatpush1.msra.mxu0 0.0
    %429 = vmatprep.subr.mxu0 0.0
    %430 = vmatpush1.msra.mxu0 0.0
    %431 = vmatprep.subr.mxu0 0.0
    %432 = vmatpush1.msra.mxu0 0.0
    %433 = vmatprep.mubr.f32.mxu0 0.0
    %434 = vmatmul.mubr.f32.gmra.mrb[0].mxu0 %v364
    %v435 = vpop.f32.mrb[0].mxu0
    %v436 = vadd.f32 0.0, %v435
    %v437 = vpop.f32.mrb[0].mxu0
    %438 = vmatprep.mubr.f32.mxu0 0.0
    %439 = vmatmul.mubr.f32.gmra.mrb[0].mxu0 %v367
    %v440 = vpop.f32.mrb[0].mxu0
    %v441 = vadd.f32 0.0, %v440
    %v442 = vpop.f32.mrb[0].mxu0
    %443 = vdwg.mxu0
    %v444 = vlaneseq
    %v445 = vshrl.u32 %v444, 7
    %v446 = vsub.s32 0, %v445
    %v447 = vrot.slane %v76, %v446
    %v448 = vmul.f32 %v436, %v447
    %v449 = vmul.f32 %v441, %v447
    %450 = vadd.xlane.f32.xlu0 %v448
    %v451 = vpop.xlane.xlu0 %450
    %452 = vadd.xlane.f32.xlu0 %v449
    %v453 = vpop.xlane.xlu0 %452
    %454 = vmatprep.subr.mxu0 0.0
    %455 = vmatpush1.xpose.msra.mxu0 %v436
    %456 = vmatprep.subr.mxu0 0.0
    %457 = vmatpush1.xpose.msra.mxu0 %v441
    %458 = vmatprep.subr.mxu0 0.0
    %459 = vmatpush1.xpose.msra.mxu0 0.0
    %460 = vmatprep.subr.mxu0 0.0
    %461 = vmatpush1.xpose.msra.mxu0 0.0
    %462 = vmatprep.subr.mxu0 0.0
    %463 = vmatpush1.xpose.msra.mxu0 0.0
    %464 = vmatprep.subr.mxu0 0.0
    %465 = vmatpush1.xpose.msra.mxu0 0.0
    %466 = vmatprep.subr.mxu0 0.0
    %467 = vmatpush1.xpose.msra.mxu0 0.0
    %468 = vmatprep.subr.mxu0 0.0
    %469 = vmatpush1.xpose.msra.mxu0 0.0
    %470 = vmatprep.subr.mxu0 0.0
    %471 = vmatpush1.xpose.msra.mxu0 0.0
    %472 = vmatprep.subr.mxu0 0.0
    %473 = vmatpush1.xpose.msra.mxu0 0.0
    %474 = vmatprep.subr.mxu0 0.0
    %475 = vmatpush1.xpose.msra.mxu0 0.0
    %476 = vmatprep.subr.mxu0 0.0
    %477 = vmatpush1.xpose.msra.mxu0 0.0
    %478 = vmatprep.subr.mxu0 0.0
    %479 = vmatpush1.xpose.msra.mxu0 0.0
    %480 = vmatprep.subr.mxu0 0.0
    %481 = vmatpush1.xpose.msra.mxu0 0.0
    %482 = vmatprep.subr.mxu0 0.0
    %483 = vmatpush1.xpose.msra.mxu0 0.0
    %484 = vmatprep.subr.mxu0 0.0
    %485 = vmatpush1.xpose.msra.mxu0 0.0
    %486 = vmatprep.subr.mxu0 0.0
    %487 = vmatpush1.xpose.msra.mxu0 0.0
    %488 = vmatprep.subr.mxu0 0.0
    %489 = vmatpush1.xpose.msra.mxu0 0.0
    %490 = vmatprep.subr.mxu0 0.0
    %491 = vmatpush1.xpose.msra.mxu0 0.0
    %492 = vmatprep.subr.mxu0 0.0
    %493 = vmatpush1.xpose.msra.mxu0 0.0
    %494 = vmatprep.subr.mxu0 0.0
    %495 = vmatpush1.xpose.msra.mxu0 0.0
    %496 = vmatprep.subr.mxu0 0.0
    %497 = vmatpush1.xpose.msra.mxu0 0.0
    %498 = vmatprep.subr.mxu0 0.0
    %499 = vmatpush1.xpose.msra.mxu0 0.0
    %500 = vmatprep.subr.mxu0 0.0
    %501 = vmatpush1.xpose.msra.mxu0 0.0
    %502 = vmatprep.subr.mxu0 0.0
    %503 = vmatpush1.xpose.msra.mxu0 0.0
    %504 = vmatprep.subr.mxu0 0.0
    %505 = vmatpush1.xpose.msra.mxu0 0.0
    %506 = vmatprep.subr.mxu0 0.0
    %507 = vmatpush1.xpose.msra.mxu0 0.0
    %508 = vmatprep.subr.mxu0 0.0
    %509 = vmatpush1.xpose.msra.mxu0 0.0
    %510 = vmatprep.subr.mxu0 0.0
    %511 = vmatpush1.xpose.msra.mxu0 0.0
    %512 = vmatprep.subr.mxu0 0.0
    %513 = vmatpush1.xpose.msra.mxu0 0.0
    %514 = vmatprep.subr.mxu0 0.0
    %515 = vmatpush1.xpose.msra.mxu0 0.0
    %516 = vmatprep.subr.mxu0 0.0
    %517 = vmatpush1.xpose.msra.mxu0 0.0
    %518 = vmatprep.mubr.f32.mxu0 0.0
    %519 = vmatmul.mubr.f32.gmra.mrb[0].mxu0 %v75
    %v520 = vpop.f32.mrb[0].mxu0
    %v521 = vadd.f32 0.0, %v520
    %v522 = vpop.f32.mrb[0].mxu0
    %523 = vdwg.mxu0
    %v524 = vlaneseq
    %v525 = vshrl.u32 %v524, 7
    %v526 = vsub.s32 0, %v525
    %v527 = vrot.slane %v521, %v526
    %v528 = vadd.f32 %v451, %v527
    %v529 = vadd.f32 %v453, %v527
    %vm530 = vcmp.gt.f32.partialorder %v528, 0.0
    %vm531 = vcmp.gt.f32.partialorder %v529, 0.0
    %v532 = vmul.f32 %v528, 0.2
    %v533 = vmul.f32 %v529, 0.2
    %v534 = vsel %vm530, %v528, %v532
    %v535 = vsel %vm531, %v529, %v533
    %v536 = vadd.f32 %v534, %v65
    %v537 = vadd.f32 %v535, %v66
    %v538 = vsel %vm78, %v536, -inf
    %539 = vmax.xlane.f32.xlu0 %v538
    %v540 = vpop.xlane.xlu0 %539
    %v541 = vsel %vm78, %v537, -inf
    %542 = vmax.xlane.f32.xlu0 %v541
    %v543 = vpop.xlane.xlu0 %542
    %v544 = vsub.f32 %v536, %v540
    %v545 = vsub.f32 %v537, %v543
    %v546 = vmul.f32 %v544, 1.442695
    %v547 = vpow.pop %v546
    %v548 = vmul.f32 %v545, 1.442695
    %v549 = vpow.pop %v548
    %v550 = vsel %vm78, %v547, 0.0
    %551 = vadd.xlane.f32.xlu0 %v550
    %v552 = vpop.xlane.xlu0 %551
    %v553 = vsel %vm78, %v549, 0.0
    %554 = vadd.xlane.f32.xlu0 %v553
    %v555 = vpop.xlane.xlu0 %554
    %v556 = vrcp.pop %v552
    %v557 = vrcp.pop %v555
    %v558 = vmul.f32 %v547, %v556
    %v559 = vmul.f32 %v549, %v557
    %v560 = vlaneseq
    %v561 = vshrl.u32 %v560, 7
    %v562 = vsub.s32 0, %v561
    %v563 = vrot.slane %v77, %v562
    %v565 = vsel %vm78, %v558, 0
    %v568 = vsel %vm78, %v559, 0
    %570 = vmatprep.subr.mxu0 0.0
    %571 = vmatpush1.msra.mxu0 %v436
    %572 = vmatprep.subr.mxu0 0.0
    %573 = vmatpush1.msra.mxu0 %v441
    %574 = vmatprep.subr.mxu0 0.0
    %575 = vmatpush1.msra.mxu0 0.0
    %576 = vmatprep.subr.mxu0 0.0
    %577 = vmatpush1.msra.mxu0 0.0
    %578 = vmatprep.subr.mxu0 0.0
    %579 = vmatpush1.msra.mxu0 0.0
    %580 = vmatprep.subr.mxu0 0.0
    %581 = vmatpush1.msra.mxu0 0.0
    %582 = vmatprep.subr.mxu0 0.0
    %583 = vmatpush1.msra.mxu0 0.0
    %584 = vmatprep.subr.mxu0 0.0
    %585 = vmatpush1.msra.mxu0 0.0
    %586 = vmatprep.subr.mxu0 0.0
    %587 = vmatpush1.msra.mxu0 0.0
    %588 = vmatprep.subr.mxu0 0.0
    %589 = vmatpush1.msra.mxu0 0.0
    %590 = vmatprep.subr.mxu0 0.0
    %591 = vmatpush1.msra.mxu0 0.0
    %592 = vmatprep.subr.mxu0 0.0
    %593 = vmatpush1.msra.mxu0 0.0
    %594 = vmatprep.subr.mxu0 0.0
    %595 = vmatpush1.msra.mxu0 0.0
    %596 = vmatprep.subr.mxu0 0.0
    %597 = vmatpush1.msra.mxu0 0.0
    %598 = vmatprep.subr.mxu0 0.0
    %599 = vmatpush1.msra.mxu0 0.0
    %600 = vmatprep.subr.mxu0 0.0
    %601 = vmatpush1.msra.mxu0 0.0
    %602 = vmatprep.subr.mxu0 0.0
    %603 = vmatpush1.msra.mxu0 0.0
    %604 = vmatprep.subr.mxu0 0.0
    %605 = vmatpush1.msra.mxu0 0.0
    %606 = vmatprep.subr.mxu0 0.0
    %607 = vmatpush1.msra.mxu0 0.0
    %608 = vmatprep.subr.mxu0 0.0
    %609 = vmatpush1.msra.mxu0 0.0
    %610 = vmatprep.subr.mxu0 0.0
    %611 = vmatpush1.msra.mxu0 0.0
    %612 = vmatprep.subr.mxu0 0.0
    %613 = vmatpush1.msra.mxu0 0.0
    %614 = vmatprep.subr.mxu0 0.0
    %615 = vmatpush1.msra.mxu0 0.0
    %616 = vmatprep.subr.mxu0 0.0
    %617 = vmatpush1.msra.mxu0 0.0
    %618 = vmatprep.subr.mxu0 0.0
    %619 = vmatpush1.msra.mxu0 0.0
    %620 = vmatprep.subr.mxu0 0.0
    %621 = vmatpush1.msra.mxu0 0.0
    %622 = vmatprep.subr.mxu0 0.0
    %623 = vmatpush1.msra.mxu0 0.0
    %624 = vmatprep.subr.mxu0 0.0
    %625 = vmatpush1.msra.mxu0 0.0
    %626 = vmatprep.subr.mxu0 0.0
    %627 = vmatpush1.msra.mxu0 0.0
    %628 = vmatprep.subr.mxu0 0.0
    %629 = vmatpush1.msra.mxu0 0.0
    %630 = vmatprep.subr.mxu0 0.0
    %631 = vmatpush1.msra.mxu0 0.0
    %632 = vmatprep.subr.mxu0 0.0
    %633 = vmatpush1.msra.mxu0 0.0
    %634 = vmatprep.mubr.f32.mxu0 0.0
    %635 = vmatmul.mubr.f32.gmra.mrb[0].mxu0 %v565
    %v636 = vpop.f32.mrb[0].mxu0
    %v637 = vadd.f32 %v563, %v636
    %v638 = vpop.f32.mrb[0].mxu0
    %639 = vmatprep.mubr.f32.mxu0 0.0
    %640 = vmatmul.mubr.f32.gmra.mrb[0].mxu0 %v568
    %v641 = vpop.f32.mrb[0].mxu0
    %v642 = vadd.f32 %v563, %v641
    %v643 = vpop.f32.mrb[0].mxu0
    %644 = vdwg.mxu0
    %v645 = vlaneseq
    %v646 = vand.u32 %v645, 127
    %vm647 = vcmp.lt.s32.totalorder %v646, 7
    %v648 = vsel %vm647, %v637, -1e+30
    %v649 = vsel %vm647, %v642, -1e+30
    %650 = vmax.xlane.f32.xlu0 %v648
    %v651 = vpop.xlane.xlu0 %650
    %652 = vmax.xlane.f32.xlu0 %v649
    %v653 = vpop.xlane.xlu0 %652
    %v654 = vsub.f32 %v648, %v651
    %v655 = vsub.f32 %v649, %v653
    %v656 = vmul.f32 %v654, 1.442695
    %v657 = vpow.pop %v656
    %v658 = vmul.f32 %v655, 1.442695
    %v659 = vpow.pop %v658
    %660 = vadd.xlane.f32.xlu0 %v657
    %v661 = vpop.xlane.xlu0 %660
    %662 = vadd.xlane.f32.xlu0 %v659
    %v663 = vpop.xlane.xlu0 %662
    %v664 = vrcp.pop %v661
    %v665 = vmul.f32 %v657, %v664
    %v666 = vrcp.pop %v663
    %v667 = vmul.f32 %v659, %v666
    %668 = vst [vmem:[#allocation8] sm:$0xff] %v665
    %669 = vst [vmem:[#allocation8 + $0x8] sm:$0xff] %v667
    // Predicated region
    $region30: #{tpu_custom_call.1} parent=1 // pred_check
      _
    $region31: #{tpu_custom_call.1} parent=1 // pred_check_branch
      %671 = sbr.rel (0) target = $region33
    $region32: #{tpu_custom_call.1} parent=1 // pred_region
      %s673 = ssub.s32 256, 256
      %674 = vsyncadd [#allocation4], %s673
      %s675 = sshll.u32 [#allocation8], 4
      %s676 = int_to_ptr.vmem [resolvable:$true] %s675
      %681 = dma.vmem_to_hbm [thread:$0]  %s676, 256, %s4, [#allocation4], 128, 128, 8
    $region33: #{tpu_custom_call.1} parent=1 // pred_fallthru
      _
    // Predicated region
    $region34: #{tpu_custom_call.1} parent=1 // pred_check
      _
    $region35: #{tpu_custom_call.1} parent=1 // pred_check_branch
      %683 = sbr.rel (0) target = $region37
    $region36: #{tpu_custom_call.1} parent=1 // pred_region
      %684 = dma.done [#allocation4], 256
    $region37: #{tpu_custom_call.1} parent=1 // pred_fallthru
      _
    %685 = vsyncpa [#allocation3], 1
    %686 = vsyncpa [#allocation6], 1
    %687 = vsyncpa [#allocation4], 1

</llo_original>
